<compile_context>
chip_gen: v7x
topology: tpu7x:2x2x1
jax: 0.10.0
libtpu: 0.0.40
codegen_flags: <defaults>
</compile_context>

<pallas_src>
import jax
import jax.numpy as jnp
from jax import lax
from jax.experimental import pallas as pl
from jax.experimental.pallas import tpu as pltpu


def _round_up(a, m):
    return ((a + m - 1) // m) * m


def _mlp_kernel_t(xt_ref, w1t_ref, b1_ref, w2t_ref, b2_ref, w3t_ref, b3_ref,
                  ot_ref):
    """Feature-major fused MLP: every activation is (features, batch)."""
    xt = xt_ref[...]                       # (in_dim, bb)  f32
    w1t = w1t_ref[...]                     # (hid, in_dim) f32
    in_dim = xt.shape[0]
    bb = xt.shape[1]
    hid = w1t.shape[0]

    # ---- Layer 1 on the VPU (K = in_dim = 10) -----------------------------
    # Unrolled outer-product MAC: batch fills all 128 lanes, the per-k x row
    # is a sublane broadcast and the w1 column a single lane broadcast.
    # Cheaper than an MXU push that would use only 10 of 128 K lanes, and it
    # keeps the input in f32 until the h1 -> bf16 cast below.
    h1 = jnp.broadcast_to(b1_ref[...], (hid, bb))          # start from bias
    for k in range(in_dim):                                 # static unroll
        h1 = h1 + w1t[:, k:k + 1] * xt[k:k + 1, :]
    h1 = jnp.maximum(h1, 0.0)

    # ---- Layers 2 & 3 on the MXU: bf16 operands, f32 accumulation ---------
    # (hid,hid)@(hid,bb) and (out,hid)@(hid,bb): M is tiny (64 / 32 rows =>
    # 8 / 4 pushes per 256 batch columns) and N = bb fills the MXU width.
    h2 = jnp.dot(w2t_ref[...], h1.astype(jnp.bfloat16),
                 preferred_element_type=jnp.float32) + b2_ref[...]
    h2 = jnp.maximum(h2, 0.0)
    out = jnp.dot(w3t_ref[...], h2.astype(jnp.bfloat16),
                  preferred_element_type=jnp.float32) + b3_ref[...]
    ot_ref[...] = out.astype(ot_ref.dtype)


def _choose_tiling(B, block_b):
    """Return (block_b, B_pad). Single full block for small B (no padding);
    otherwise a 128-aligned tile, default 4096, capped at ceil(B/4) so v7x
    gets >=4 grid steps (>=2 per TensorCore) for pipelining."""
    if block_b is not None:
        block_b = int(block_b)
        if block_b >= B:
            return B, B
        block_b = _round_up(max(block_b, 128), 128)
        if block_b >= B:
            return B, B
        return block_b, _round_up(B, block_b)
    if B <= 1024:
        return B, B
    quarter = _round_up(-(-B // 4), 128)
    block_b = max(128, min(4096, quarter))
    return block_b, _round_up(B, block_b)


def spatial_relation_encoder(x, params, *, block_b=None):
    """Run the fused MLP kernel.

    x: [B, input_dim] float32  (module semantics preserved: returns [B, out]).
    params: dict with w1 [in,h], b1 [1,h], w2 [h,h], b2 [1,h], w3 [h,out],
            b3 [1,out]  (same layout as before; transposition happens here).
    block_b: optional batch tile (rounded to a multiple of 128 when tiling).
    """
    x = x.astype(jnp.float32)
    B, in_dim = x.shape
    hid = params["w1"].shape[1]
    out_dim = params["w3"].shape[1]

    block_b, B_pad = _choose_tiling(B, block_b)
    grid = (B_pad // block_b,)

    # Feature-major input: one wrapper transpose in (and one out below).
    # For ragged large batches, pad only up to block_b-1 tail columns.
    xt = x.T                                               # (in_dim, B)
    if B_pad != B:
        xt = jnp.pad(xt, ((0, 0), (0, B_pad - B)))

    # Weights transposed for feature-major compute; layer-1 stays f32 (VPU
    # path), layers 2/3 are bf16 MXU operands; biases are column vectors.
    w1t = params["w1"].T.astype(jnp.float32)               # (hid, in_dim)
    b1 = params["b1"].reshape(-1, 1).astype(jnp.float32)   # (hid, 1)
    w2t = params["w2"].T.astype(jnp.bfloat16)               # (hid, hid)
    b2 = params["b2"].reshape(-1, 1).astype(jnp.float32)   # (hid, 1)
    w3t = params["w3"].T.astype(jnp.bfloat16)               # (out_dim, hid)
    b3 = params["b3"].reshape(-1, 1).astype(jnp.float32)   # (out_dim, 1)

    full = lambda i: (0, 0)   # weights/biases: same (full) block every step

    out_t = pl.pallas_call(
        _mlp_kernel_t,
        out_shape=jax.ShapeDtypeStruct((out_dim, B_pad), x.dtype),
        grid_spec=pltpu.PrefetchScalarGridSpec(
            num_scalar_prefetch=0,
            grid=grid,
            in_specs=[
                pl.BlockSpec((in_dim, block_b), lambda i: (0, i)),
                pl.BlockSpec((hid, in_dim), full),
                pl.BlockSpec((hid, 1), full),
                pl.BlockSpec((hid, hid), full),
                pl.BlockSpec((hid, 1), full),
                pl.BlockSpec((out_dim, hid), full),
                pl.BlockSpec((out_dim, 1), full),
            ],
            out_specs=pl.BlockSpec((out_dim, block_b), lambda i: (0, i)),
        ),
        compiler_params=pltpu.CompilerParams(
            dimension_semantics=("parallel",)),
    )(xt, w1t, b1, w2t, b2, w3t, b3)

    if B_pad != B:
        out_t = out_t[:, :B]   # padded tail columns are garbage (ReLU(b1))
    return out_t.T             # back to (B, out_dim) module semantics


def init_params(key, input_dim=10, hidden_dim=64, output_dim=32):
    """Deterministic init mimicking nn.Linear's uniform(-1/sqrt(fan_in), ...)."""
    ks = jax.random.split(key, 6)

    def linear(kw, kb, fan_in, fan_out):
        bound = 1.0 / jnp.sqrt(float(fan_in))
        w = jax.random.uniform(kw, (fan_in, fan_out), jnp.float32, -bound, bound)
        b = jax.random.uniform(kb, (1, fan_out), jnp.float32, -bound, bound)
        return w, b

    w1, b1 = linear(ks[0], ks[1], input_dim, hidden_dim)
    w2, b2 = linear(ks[2], ks[3], hidden_dim, hidden_dim)
    w3, b3 = linear(ks[4], ks[5], hidden_dim, output_dim)
    return dict(w1=w1, b1=b1, w2=w2, b2=b2, w3=w3, b3=b3)


def _reference(x, p):
    """Pure f32 reference (precision=HIGHEST so it is the 'true' answer)."""
    dot = lambda a, b: jnp.dot(a, b, precision=lax.Precision.HIGHEST)
    h1 = jnp.maximum(dot(x, p["w1"]) + p["b1"], 0.0)
    h2 = jnp.maximum(dot(h1, p["w2"]) + p["b2"], 0.0)
    return dot(h2, p["w3"]) + p["b3"]


if __name__ == "__main__":
    key = jax.random.PRNGKey(0)
    k_param, k_x = jax.random.split(key)

    B, INPUT_DIM, HIDDEN_DIM, OUTPUT_DIM = 8, 10, 64, 32
    params = init_params(k_param, INPUT_DIM, HIDDEN_DIM, OUTPUT_DIM)
    x = jax.random.normal(k_x, (B, INPUT_DIM), jnp.float32)

    out = jax.block_until_ready(spatial_relation_encoder(x, params))
    ref = _reference(x, params)
    assert out.shape == (B, OUTPUT_DIM)
    # Layers 2/3 use bf16 MXU operands (f32 accumulation), so compare against
    # the full-f32 reference at bf16-operand tolerance.
    assert jnp.allclose(out, ref, atol=5e-2, rtol=5e-2), float(
        jnp.max(jnp.abs(out - ref)))

    # Second check: ragged batch with an explicit small tile exercises the
    # multi-step grid (double-buffered pipeline, "parallel" axis for v7x
    # megacore) and the tail-block padding + slice-back path.
    B2 = 300
    x2 = jax.random.normal(jax.random.PRNGKey(1), (B2, INPUT_DIM), jnp.float32)
    out2 = jax.block_until_ready(
        spatial_relation_encoder(x2, params, block_b=128))
    ref2 = _reference(x2, params)
    assert out2.shape == (B2, OUTPUT_DIM)
    assert jnp.allclose(out2, ref2, atol=5e-2, rtol=5e-2), float(
        jnp.max(jnp.abs(out2 - ref2)))

    print("KERNEL_OK")
</pallas_src>

<mosaic_0001>
module attributes {stable_mosaic.version = 11 : i64} {
  func.func @_mlp_kernel_t(%arg0: i32, %arg1: memref<10x8xf32, #tpu.memory_space<vmem>>, %arg2: memref<64x10xf32, #tpu.memory_space<vmem>>, %arg3: memref<64x1xf32, #tpu.memory_space<vmem>>, %arg4: memref<64x64xbf16, #tpu.memory_space<vmem>>, %arg5: memref<64x1xf32, #tpu.memory_space<vmem>>, %arg6: memref<32x64xbf16, #tpu.memory_space<vmem>>, %arg7: memref<32x1xf32, #tpu.memory_space<vmem>>, %arg8: memref<32x8xf32, #tpu.memory_space<vmem>>) attributes {dimension_semantics = [#tpu.dimension_semantics<parallel>], iteration_bounds = array<i64: 1>, scalar_prefetch = 0 : i64, scratch_operands = 0 : i64, tpu.core_type = #tpu.core_type<tc>, window_params = [{transform_indices = @transform_0, window_bounds = array<i64: 10, 8>}, {pipeline_mode = #tpu.pipeline_mode<synchronous>, transform_indices = @transform_1, window_bounds = array<i64: 64, 10>}, {pipeline_mode = #tpu.pipeline_mode<synchronous>, transform_indices = @transform_2, window_bounds = array<i64: 64, 1>}, {pipeline_mode = #tpu.pipeline_mode<synchronous>, transform_indices = @transform_3, window_bounds = array<i64: 64, 64>}, {pipeline_mode = #tpu.pipeline_mode<synchronous>, transform_indices = @transform_4, window_bounds = array<i64: 64, 1>}, {pipeline_mode = #tpu.pipeline_mode<synchronous>, transform_indices = @transform_5, window_bounds = array<i64: 32, 64>}, {pipeline_mode = #tpu.pipeline_mode<synchronous>, transform_indices = @transform_6, window_bounds = array<i64: 32, 1>}, {transform_indices = @transform_7, window_bounds = array<i64: 32, 8>}]} {
    %c0 = arith.constant 0 : index
    %c0_0 = arith.constant 0 : index
    %0 = vector.load %arg1[%c0, %c0_0] : memref<10x8xf32, #tpu.memory_space<vmem>>, vector<10x8xf32>
    %c0_1 = arith.constant 0 : index
    %c0_2 = arith.constant 0 : index
    %1 = vector.load %arg2[%c0_1, %c0_2] : memref<64x10xf32, #tpu.memory_space<vmem>>, vector<64x10xf32>
    %c0_3 = arith.constant 0 : index
    %c0_4 = arith.constant 0 : index
    %2 = vector.load %arg3[%c0_3, %c0_4] : memref<64x1xf32, #tpu.memory_space<vmem>>, vector<64x1xf32>
    %3 = vector.shape_cast %2 : vector<64x1xf32> to vector<64x1xf32>
    %4 = vector.broadcast %3 : vector<64x1xf32> to vector<64x8xf32>
    %5 = vector.extract_strided_slice %1 {offsets = [0, 0], sizes = [64, 1], strides = [1, 1]} : vector<64x10xf32> to vector<64x1xf32>
    %6 = vector.extract_strided_slice %0 {offsets = [0, 0], sizes = [1, 8], strides = [1, 1]} : vector<10x8xf32> to vector<1x8xf32>
    %7 = vector.broadcast %5 : vector<64x1xf32> to vector<64x8xf32>
    %8 = vector.broadcast %6 : vector<1x8xf32> to vector<64x8xf32>
    %9 = arith.mulf %7, %8 : vector<64x8xf32>
    %10 = arith.addf %4, %9 : vector<64x8xf32>
    %11 = vector.extract_strided_slice %1 {offsets = [0, 1], sizes = [64, 1], strides = [1, 1]} : vector<64x10xf32> to vector<64x1xf32>
    %12 = vector.extract_strided_slice %0 {offsets = [1, 0], sizes = [1, 8], strides = [1, 1]} : vector<10x8xf32> to vector<1x8xf32>
    %13 = vector.broadcast %11 : vector<64x1xf32> to vector<64x8xf32>
    %14 = vector.broadcast %12 : vector<1x8xf32> to vector<64x8xf32>
    %15 = arith.mulf %13, %14 : vector<64x8xf32>
    %16 = arith.addf %10, %15 : vector<64x8xf32>
    %17 = vector.extract_strided_slice %1 {offsets = [0, 2], sizes = [64, 1], strides = [1, 1]} : vector<64x10xf32> to vector<64x1xf32>
    %18 = vector.extract_strided_slice %0 {offsets = [2, 0], sizes = [1, 8], strides = [1, 1]} : vector<10x8xf32> to vector<1x8xf32>
    %19 = vector.broadcast %17 : vector<64x1xf32> to vector<64x8xf32>
    %20 = vector.broadcast %18 : vector<1x8xf32> to vector<64x8xf32>
    %21 = arith.mulf %19, %20 : vector<64x8xf32>
    %22 = arith.addf %16, %21 : vector<64x8xf32>
    %23 = vector.extract_strided_slice %1 {offsets = [0, 3], sizes = [64, 1], strides = [1, 1]} : vector<64x10xf32> to vector<64x1xf32>
    %24 = vector.extract_strided_slice %0 {offsets = [3, 0], sizes = [1, 8], strides = [1, 1]} : vector<10x8xf32> to vector<1x8xf32>
    %25 = vector.broadcast %23 : vector<64x1xf32> to vector<64x8xf32>
    %26 = vector.broadcast %24 : vector<1x8xf32> to vector<64x8xf32>
    %27 = arith.mulf %25, %26 : vector<64x8xf32>
    %28 = arith.addf %22, %27 : vector<64x8xf32>
    %29 = vector.extract_strided_slice %1 {offsets = [0, 4], sizes = [64, 1], strides = [1, 1]} : vector<64x10xf32> to vector<64x1xf32>
    %30 = vector.extract_strided_slice %0 {offsets = [4, 0], sizes = [1, 8], strides = [1, 1]} : vector<10x8xf32> to vector<1x8xf32>
    %31 = vector.broadcast %29 : vector<64x1xf32> to vector<64x8xf32>
    %32 = vector.broadcast %30 : vector<1x8xf32> to vector<64x8xf32>
    %33 = arith.mulf %31, %32 : vector<64x8xf32>
    %34 = arith.addf %28, %33 : vector<64x8xf32>
    %35 = vector.extract_strided_slice %1 {offsets = [0, 5], sizes = [64, 1], strides = [1, 1]} : vector<64x10xf32> to vector<64x1xf32>
    %36 = vector.extract_strided_slice %0 {offsets = [5, 0], sizes = [1, 8], strides = [1, 1]} : vector<10x8xf32> to vector<1x8xf32>
    %37 = vector.broadcast %35 : vector<64x1xf32> to vector<64x8xf32>
    %38 = vector.broadcast %36 : vector<1x8xf32> to vector<64x8xf32>
    %39 = arith.mulf %37, %38 : vector<64x8xf32>
    %40 = arith.addf %34, %39 : vector<64x8xf32>
    %41 = vector.extract_strided_slice %1 {offsets = [0, 6], sizes = [64, 1], strides = [1, 1]} : vector<64x10xf32> to vector<64x1xf32>
    %42 = vector.extract_strided_slice %0 {offsets = [6, 0], sizes = [1, 8], strides = [1, 1]} : vector<10x8xf32> to vector<1x8xf32>
    %43 = vector.broadcast %41 : vector<64x1xf32> to vector<64x8xf32>
    %44 = vector.broadcast %42 : vector<1x8xf32> to vector<64x8xf32>
    %45 = arith.mulf %43, %44 : vector<64x8xf32>
    %46 = arith.addf %40, %45 : vector<64x8xf32>
    %47 = vector.extract_strided_slice %1 {offsets = [0, 7], sizes = [64, 1], strides = [1, 1]} : vector<64x10xf32> to vector<64x1xf32>
    %48 = vector.extract_strided_slice %0 {offsets = [7, 0], sizes = [1, 8], strides = [1, 1]} : vector<10x8xf32> to vector<1x8xf32>
    %49 = vector.broadcast %47 : vector<64x1xf32> to vector<64x8xf32>
    %50 = vector.broadcast %48 : vector<1x8xf32> to vector<64x8xf32>
    %51 = arith.mulf %49, %50 : vector<64x8xf32>
    %52 = arith.addf %46, %51 : vector<64x8xf32>
    %53 = vector.extract_strided_slice %1 {offsets = [0, 8], sizes = [64, 1], strides = [1, 1]} : vector<64x10xf32> to vector<64x1xf32>
    %54 = vector.extract_strided_slice %0 {offsets = [8, 0], sizes = [1, 8], strides = [1, 1]} : vector<10x8xf32> to vector<1x8xf32>
    %55 = vector.broadcast %53 : vector<64x1xf32> to vector<64x8xf32>
    %56 = vector.broadcast %54 : vector<1x8xf32> to vector<64x8xf32>
    %57 = arith.mulf %55, %56 : vector<64x8xf32>
    %58 = arith.addf %52, %57 : vector<64x8xf32>
    %59 = vector.extract_strided_slice %1 {offsets = [0, 9], sizes = [64, 1], strides = [1, 1]} : vector<64x10xf32> to vector<64x1xf32>
    %60 = vector.extract_strided_slice %0 {offsets = [9, 0], sizes = [1, 8], strides = [1, 1]} : vector<10x8xf32> to vector<1x8xf32>
    %61 = vector.broadcast %59 : vector<64x1xf32> to vector<64x8xf32>
    %62 = vector.broadcast %60 : vector<1x8xf32> to vector<64x8xf32>
    %63 = arith.mulf %61, %62 : vector<64x8xf32>
    %64 = arith.addf %58, %63 : vector<64x8xf32>
    %cst = arith.constant 0.000000e+00 : f32
    %65 = vector.broadcast %cst : f32 to vector<64x8xf32>
    %66 = arith.maximumf %64, %65 : vector<64x8xf32>
    %c0_5 = arith.constant 0 : index
    %c0_6 = arith.constant 0 : index
    %67 = vector.load %arg4[%c0_5, %c0_6] : memref<64x64xbf16, #tpu.memory_space<vmem>>, vector<64x64xbf16>
    %68 = arith.truncf %66 : vector<64x8xf32> to vector<64x8xbf16>
    %cst_7 = arith.constant dense<0.000000e+00> : vector<64x8xf32>
    %69 = tpu.matmul %67, %68, %cst_7 {dimension_numbers = #tpu.dot_dimension_numbers<[1], [0], [0], [1], [0, 0, 1, 1], [], []>} : vector<64x64xbf16>, vector<64x8xbf16>, vector<64x8xf32> -> vector<64x8xf32>
    %c0_8 = arith.constant 0 : index
    %c0_9 = arith.constant 0 : index
    %70 = vector.load %arg5[%c0_8, %c0_9] : memref<64x1xf32, #tpu.memory_space<vmem>>, vector<64x1xf32>
    %71 = vector.broadcast %70 : vector<64x1xf32> to vector<64x8xf32>
    %72 = arith.addf %69, %71 : vector<64x8xf32>
    %cst_10 = arith.constant 0.000000e+00 : f32
    %73 = vector.broadcast %cst_10 : f32 to vector<64x8xf32>
    %74 = arith.maximumf %72, %73 : vector<64x8xf32>
    %c0_11 = arith.constant 0 : index
    %c0_12 = arith.constant 0 : index
    %75 = vector.load %arg6[%c0_11, %c0_12] : memref<32x64xbf16, #tpu.memory_space<vmem>>, vector<32x64xbf16>
    %76 = arith.truncf %74 : vector<64x8xf32> to vector<64x8xbf16>
    %cst_13 = arith.constant dense<0.000000e+00> : vector<32x8xf32>
    %77 = tpu.matmul %75, %76, %cst_13 {dimension_numbers = #tpu.dot_dimension_numbers<[1], [0], [0], [1], [0, 0, 1, 1], [], []>} : vector<32x64xbf16>, vector<64x8xbf16>, vector<32x8xf32> -> vector<32x8xf32>
    %c0_14 = arith.constant 0 : index
    %c0_15 = arith.constant 0 : index
    %78 = vector.load %arg7[%c0_14, %c0_15] : memref<32x1xf32, #tpu.memory_space<vmem>>, vector<32x1xf32>
    %79 = vector.broadcast %78 : vector<32x1xf32> to vector<32x8xf32>
    %80 = arith.addf %77, %79 : vector<32x8xf32>
    %c0_16 = arith.constant 0 : index
    %c0_17 = arith.constant 0 : index
    %81 = vector.load %arg8[%c0_16, %c0_17] : memref<32x8xf32, #tpu.memory_space<vmem>>, vector<32x8xf32>
    tpu.vector_store %arg8[%c0_16, %c0_17], %80 {strides = array<i32>} : memref<32x8xf32, #tpu.memory_space<vmem>>, vector<32x8xf32>,
    return
  }
  func.func @transform_0(%arg0: i32) -> (i32, i32) {
    %c0_i32 = arith.constant 0 : i32
    %c0_i32_0 = arith.constant 0 : i32
    return %c0_i32, %arg0 : i32, i32
  }
  func.func @transform_1(%arg0: i32) -> (i32, i32) {
    %c0_i32 = arith.constant 0 : i32
    %c0_i32_0 = arith.constant 0 : i32
    %c0_i32_1 = arith.constant 0 : i32
    return %c0_i32, %c0_i32_0 : i32, i32
  }
  func.func @transform_2(%arg0: i32) -> (i32, i32) {
    %c0_i32 = arith.constant 0 : i32
    %c0_i32_0 = arith.constant 0 : i32
    %c0_i32_1 = arith.constant 0 : i32
    return %c0_i32, %c0_i32_0 : i32, i32
  }
  func.func @transform_3(%arg0: i32) -> (i32, i32) {
    %c0_i32 = arith.constant 0 : i32
    %c0_i32_0 = arith.constant 0 : i32
    %c0_i32_1 = arith.constant 0 : i32
    return %c0_i32, %c0_i32_0 : i32, i32
  }
  func.func @transform_4(%arg0: i32) -> (i32, i32) {
    %c0_i32 = arith.constant 0 : i32
    %c0_i32_0 = arith.constant 0 : i32
    %c0_i32_1 = arith.constant 0 : i32
    return %c0_i32, %c0_i32_0 : i32, i32
  }
  func.func @transform_5(%arg0: i32) -> (i32, i32) {
    %c0_i32 = arith.constant 0 : i32
    %c0_i32_0 = arith.constant 0 : i32
    %c0_i32_1 = arith.constant 0 : i32
    return %c0_i32, %c0_i32_0 : i32, i32
  }
  func.func @transform_6(%arg0: i32) -> (i32, i32) {
    %c0_i32 = arith.constant 0 : i32
    %c0_i32_0 = arith.constant 0 : i32
    %c0_i32_1 = arith.constant 0 : i32
    return %c0_i32, %c0_i32_0 : i32, i32
  }
  func.func @transform_7(%arg0: i32) -> (i32, i32) {
    %c0_i32 = arith.constant 0 : i32
    %c0_i32_0 = arith.constant 0 : i32
    return %c0_i32, %arg0 : i32, i32
  }
}

</mosaic_0001>

<llo_original>
// kernel: tpu_custom_call.1
$region0: #{tpu_custom_call.1}
  #allocation0 [shape = 'u32[]', space=smem, size = 0x4, offset = 0x4, fixed_abs, tag = 'smem constant byte address 0x4 - core index']
  #allocation1 [shape = 'u32[144,128]{1,0:T(1,128)}', space=vmem, size = 0x12000, scoped, tag = 'internal scratch']
  %s0 = inlined_call_operand.vmem [shape: f32[10,8], index: 0, kind: input, shape index: {}]
  %s1 = inlined_call_operand.vmem [shape: f32[64,10], index: 1, kind: input, shape index: {}]
  %s2 = inlined_call_operand.vmem [shape: f32[64,1], index: 2, kind: input, shape index: {}]
  %s3 = inlined_call_operand.vmem [shape: bf16[64,64], index: 3, kind: input, shape index: {}]
  %s4 = inlined_call_operand.vmem [shape: f32[64,1], index: 4, kind: input, shape index: {}]
  %s5 = inlined_call_operand.vmem [shape: bf16[32,64], index: 5, kind: input, shape index: {}]
  %s6 = inlined_call_operand.vmem [shape: f32[32,1], index: 6, kind: input, shape index: {}]
  %s7 = inlined_call_operand.vmem [shape: f32[32,8], index: 7, kind: output, shape index: {}]
  %s8 = sld [smem:[#allocation0]]
  $region38: #{tpu_custom_call.1} parent=0
    _
  %s10 = ssub.s32 1, %s8
  %s11 = scalar_select 0, %s10, %s8
  // Predicated region
  $region2: #{tpu_custom_call.1} parent=0 // pred_check
    _
  $region3: #{tpu_custom_call.1} parent=0 // pred_check_branch
    %13 = sbr.rel (0) target = $region5
  $region4: #{tpu_custom_call.1} parent=0 // pred_region
    _
  $region5: #{tpu_custom_call.1} parent=0 // pred_fallthru
    _
  // Predicated region
  $region6: #{tpu_custom_call.1} parent=0 // pred_check
    _
  $region7: #{tpu_custom_call.1} parent=0 // pred_check_branch
    %15 = sbr.rel (0) target = $region9
  $region8: #{tpu_custom_call.1} parent=0 // pred_region
    _
  $region9: #{tpu_custom_call.1} parent=0 // pred_fallthru
    _
  // Predicated region
  $region10: #{tpu_custom_call.1} parent=0 // pred_check
    _
  $region11: #{tpu_custom_call.1} parent=0 // pred_check_branch
    %17 = sbr.rel (0) target = $region13
  $region12: #{tpu_custom_call.1} parent=0 // pred_region
    _
  $region13: #{tpu_custom_call.1} parent=0 // pred_fallthru
    _
  // Predicated region
  $region14: #{tpu_custom_call.1} parent=0 // pred_check
    _
  $region15: #{tpu_custom_call.1} parent=0 // pred_check_branch
    %19 = sbr.rel (0) target = $region17
  $region16: #{tpu_custom_call.1} parent=0 // pred_region
    _
  $region17: #{tpu_custom_call.1} parent=0 // pred_fallthru
    _
  // Predicated region
  $region18: #{tpu_custom_call.1} parent=0 // pred_check
    _
  $region19: #{tpu_custom_call.1} parent=0 // pred_check_branch
    %21 = sbr.rel (0) target = $region21
  $region20: #{tpu_custom_call.1} parent=0 // pred_region
    _
  $region21: #{tpu_custom_call.1} parent=0 // pred_fallthru
    _
  // Predicated region
  $region22: #{tpu_custom_call.1} parent=0 // pred_check
    _
  $region23: #{tpu_custom_call.1} parent=0 // pred_check_branch
    %23 = sbr.rel (0) target = $region25
  $region24: #{tpu_custom_call.1} parent=0 // pred_region
    _
  $region25: #{tpu_custom_call.1} parent=0 // pred_fallthru
    _
  // Predicated region
  $region26: #{tpu_custom_call.1} parent=0 // pred_check
    _
  $region27: #{tpu_custom_call.1} parent=0 // pred_check_branch
    %25 = sbr.rel (0) target = $region29
  $region28: #{tpu_custom_call.1} parent=0 // pred_region
    _
  $region29: #{tpu_custom_call.1} parent=0 // pred_fallthru
    _
  %v27 = vld [vmem:[%s0] sm:$0xff]
  %v28 = vld [vmem:[%s0 + $0x8] sm:$0x3]
  %v29 = vld [vmem:[%s1] sm:$0xff]
  %v30 = vld [vmem:[%s1 + $0x8] sm:$0xff]
  %v31 = vld [vmem:[%s1 + $0x10] sm:$0xff]
  %v32 = vld [vmem:[%s1 + $0x18] sm:$0xff]
  %v33 = vld [vmem:[%s1 + $0x20] sm:$0xff]
  %v34 = vld [vmem:[%s1 + $0x28] sm:$0xff]
  %v35 = vld [vmem:[%s1 + $0x30] sm:$0xff]
  %v36 = vld [vmem:[%s1 + $0x38] sm:$0xff]
  %v37 = vld [vmem:[%s2] sm:$0xff]
  %v38 = vld [vmem:[%s2 + $0x8] sm:$0xff]
  %v39 = vld [vmem:[%s2 + $0x10] sm:$0xff]
  %v40 = vld [vmem:[%s2 + $0x18] sm:$0xff]
  %v41 = vld [vmem:[%s2 + $0x20] sm:$0xff]
  %v42 = vld [vmem:[%s2 + $0x28] sm:$0xff]
  %v43 = vld [vmem:[%s2 + $0x30] sm:$0xff]
  %v44 = vld [vmem:[%s2 + $0x38] sm:$0xff]
  %46 = vset.pattern.permute.xlu0 0
  %47 = vperm.xlu0 %46, %v37
  %v48 = vpop.permute.xlu0 %47
  %51 = vset.pattern.permute.xlu0 0
  %52 = vperm.xlu0 %51, %v38
  %v53 = vpop.permute.xlu0 %52
  %56 = vset.pattern.permute.xlu0 0
  %57 = vperm.xlu0 %56, %v39
  %v58 = vpop.permute.xlu0 %57
  %61 = vset.pattern.permute.xlu0 0
  %62 = vperm.xlu0 %61, %v40
  %v63 = vpop.permute.xlu0 %62
  %66 = vset.pattern.permute.xlu0 0
  %67 = vperm.xlu0 %66, %v41
  %v68 = vpop.permute.xlu0 %67
  %71 = vset.pattern.permute.xlu0 0
  %72 = vperm.xlu0 %71, %v42
  %v73 = vpop.permute.xlu0 %72
  %76 = vset.pattern.permute.xlu0 0
  %77 = vperm.xlu0 %76, %v43
  %v78 = vpop.permute.xlu0 %77
  %81 = vset.pattern.permute.xlu0 0
  %82 = vperm.xlu0 %81, %v44
  %v83 = vpop.permute.xlu0 %82
  %86 = vset.pattern.permute.xlu0 0
  %87 = vperm.xlu0 %86, %v29
  %v88 = vpop.permute.xlu0 %87
  %91 = vset.pattern.permute.xlu0 0
  %92 = vperm.xlu0 %91, %v30
  %v93 = vpop.permute.xlu0 %92
  %96 = vset.pattern.permute.xlu0 0
  %97 = vperm.xlu0 %96, %v31
  %v98 = vpop.permute.xlu0 %97
  %101 = vset.pattern.permute.xlu0 0
  %102 = vperm.xlu0 %101, %v32
  %v103 = vpop.permute.xlu0 %102
  %106 = vset.pattern.permute.xlu0 0
  %107 = vperm.xlu0 %106, %v33
  %v108 = vpop.permute.xlu0 %107
  %111 = vset.pattern.permute.xlu0 0
  %112 = vperm.xlu0 %111, %v34
  %v113 = vpop.permute.xlu0 %112
  %116 = vset.pattern.permute.xlu0 0
  %117 = vperm.xlu0 %116, %v35
  %v118 = vpop.permute.xlu0 %117
  %121 = vset.pattern.permute.xlu0 0
  %122 = vperm.xlu0 %121, %v36
  %v123 = vpop.permute.xlu0 %122
  %v125 = vlaneseq
  %v126 = vshrl.u32 %v125, 7
  %v127 = vsub.s32 0, %v126
  %v128 = vrot.slane %v27, %v127
  %v129 = vmul.f32 %v88, %v128
  %v130 = vmul.f32 %v93, %v128
  %v131 = vmul.f32 %v98, %v128
  %v132 = vmul.f32 %v103, %v128
  %v133 = vmul.f32 %v108, %v128
  %v134 = vmul.f32 %v113, %v128
  %v135 = vmul.f32 %v118, %v128
  %v136 = vmul.f32 %v123, %v128
  %v137 = vadd.f32 %v48, %v129
  %v138 = vadd.f32 %v53, %v130
  %v139 = vadd.f32 %v58, %v131
  %v140 = vadd.f32 %v63, %v132
  %v141 = vadd.f32 %v68, %v133
  %v142 = vadd.f32 %v73, %v134
  %v143 = vadd.f32 %v78, %v135
  %v144 = vadd.f32 %v83, %v136
  %145 = vset.pattern.permute.xlu0 1
  %146 = vperm.xlu0 %145, %v29
  %v147 = vpop.permute.xlu0 %146
  %149 = vset.pattern.permute.xlu0 1
  %150 = vperm.xlu0 %149, %v30
  %v151 = vpop.permute.xlu0 %150
  %153 = vset.pattern.permute.xlu0 1
  %154 = vperm.xlu0 %153, %v31
  %v155 = vpop.permute.xlu0 %154
  %157 = vset.pattern.permute.xlu0 1
  %158 = vperm.xlu0 %157, %v32
  %v159 = vpop.permute.xlu0 %158
  %161 = vset.pattern.permute.xlu0 1
  %162 = vperm.xlu0 %161, %v33
  %v163 = vpop.permute.xlu0 %162
  %165 = vset.pattern.permute.xlu0 1
  %166 = vperm.xlu0 %165, %v34
  %v167 = vpop.permute.xlu0 %166
  %169 = vset.pattern.permute.xlu0 1
  %170 = vperm.xlu0 %169, %v35
  %v171 = vpop.permute.xlu0 %170
  %173 = vset.pattern.permute.xlu0 1
  %174 = vperm.xlu0 %173, %v36
  %v175 = vpop.permute.xlu0 %174
  %v177 = vlaneseq
  %v178 = vshrl.u32 %v177, 7
  %v179 = vsub.s32 1, %v178
  %v180 = vrot.slane %v27, %v179
  %v181 = vmul.f32 %v147, %v180
  %v182 = vmul.f32 %v151, %v180
  %v183 = vmul.f32 %v155, %v180
  %v184 = vmul.f32 %v159, %v180
  %v185 = vmul.f32 %v163, %v180
  %v186 = vmul.f32 %v167, %v180
  %v187 = vmul.f32 %v171, %v180
  %v188 = vmul.f32 %v175, %v180
  %v189 = vadd.f32 %v137, %v181
  %v190 = vadd.f32 %v138, %v182
  %v191 = vadd.f32 %v139, %v183
  %v192 = vadd.f32 %v140, %v184
  %v193 = vadd.f32 %v141, %v185
  %v194 = vadd.f32 %v142, %v186
  %v195 = vadd.f32 %v143, %v187
  %v196 = vadd.f32 %v144, %v188
  %197 = vset.pattern.permute.xlu0 2
  %198 = vperm.xlu0 %197, %v29
  %v199 = vpop.permute.xlu0 %198
  %201 = vset.pattern.permute.xlu0 2
  %202 = vperm.xlu0 %201, %v30
  %v203 = vpop.permute.xlu0 %202
  %205 = vset.pattern.permute.xlu0 2
  %206 = vperm.xlu0 %205, %v31
  %v207 = vpop.permute.xlu0 %206
  %209 = vset.pattern.permute.xlu0 2
  %210 = vperm.xlu0 %209, %v32
  %v211 = vpop.permute.xlu0 %210
  %213 = vset.pattern.permute.xlu0 2
  %214 = vperm.xlu0 %213, %v33
  %v215 = vpop.permute.xlu0 %214
  %217 = vset.pattern.permute.xlu0 2
  %218 = vperm.xlu0 %217, %v34
  %v219 = vpop.permute.xlu0 %218
  %221 = vset.pattern.permute.xlu0 2
  %222 = vperm.xlu0 %221, %v35
  %v223 = vpop.permute.xlu0 %222
  %225 = vset.pattern.permute.xlu0 2
  %226 = vperm.xlu0 %225, %v36
  %v227 = vpop.permute.xlu0 %226
  %v229 = vlaneseq
  %v230 = vshrl.u32 %v229, 7
  %v231 = vsub.s32 2, %v230
  %v232 = vrot.slane %v27, %v231
  %v233 = vmul.f32 %v199, %v232
  %v234 = vmul.f32 %v203, %v232
  %v235 = vmul.f32 %v207, %v232
  %v236 = vmul.f32 %v211, %v232
  %v237 = vmul.f32 %v215, %v232
  %v238 = vmul.f32 %v219, %v232
  %v239 = vmul.f32 %v223, %v232
  %v240 = vmul.f32 %v227, %v232
  %v241 = vadd.f32 %v189, %v233
  %v242 = vadd.f32 %v190, %v234
  %v243 = vadd.f32 %v191, %v235
  %v244 = vadd.f32 %v192, %v236
  %v245 = vadd.f32 %v193, %v237
  %v246 = vadd.f32 %v194, %v238
  %v247 = vadd.f32 %v195, %v239
  %v248 = vadd.f32 %v196, %v240
  %249 = vset.pattern.permute.xlu0 3
  %250 = vperm.xlu0 %249, %v29
  %v251 = vpop.permute.xlu0 %250
  %253 = vset.pattern.permute.xlu0 3
  %254 = vperm.xlu0 %253, %v30
  %v255 = vpop.permute.xlu0 %254
  %257 = vset.pattern.permute.xlu0 3
  %258 = vperm.xlu0 %257, %v31
  %v259 = vpop.permute.xlu0 %258
  %261 = vset.pattern.permute.xlu0 3
  %262 = vperm.xlu0 %261, %v32
  %v263 = vpop.permute.xlu0 %262
  %265 = vset.pattern.permute.xlu0 3
  %266 = vperm.xlu0 %265, %v33
  %v267 = vpop.permute.xlu0 %266
  %269 = vset.pattern.permute.xlu0 3
  %270 = vperm.xlu0 %269, %v34
  %v271 = vpop.permute.xlu0 %270
  %273 = vset.pattern.permute.xlu0 3
  %274 = vperm.xlu0 %273, %v35
  %v275 = vpop.permute.xlu0 %274
  %277 = vset.pattern.permute.xlu0 3
  %278 = vperm.xlu0 %277, %v36
  %v279 = vpop.permute.xlu0 %278
  %v281 = vlaneseq
  %v282 = vshrl.u32 %v281, 7
  %v283 = vsub.s32 3, %v282
  %v284 = vrot.slane %v27, %v283
  %v285 = vmul.f32 %v251, %v284
  %v286 = vmul.f32 %v255, %v284
  %v287 = vmul.f32 %v259, %v284
  %v288 = vmul.f32 %v263, %v284
  %v289 = vmul.f32 %v267, %v284
  %v290 = vmul.f32 %v271, %v284
  %v291 = vmul.f32 %v275, %v284
  %v292 = vmul.f32 %v279, %v284
  %v293 = vadd.f32 %v241, %v285
  %v294 = vadd.f32 %v242, %v286
  %v295 = vadd.f32 %v243, %v287
  %v296 = vadd.f32 %v244, %v288
  %v297 = vadd.f32 %v245, %v289
  %v298 = vadd.f32 %v246, %v290
  %v299 = vadd.f32 %v247, %v291
  %v300 = vadd.f32 %v248, %v292
  %301 = vset.pattern.permute.xlu0 4
  %302 = vperm.xlu0 %301, %v29
  %v303 = vpop.permute.xlu0 %302
  %305 = vset.pattern.permute.xlu0 4
  %306 = vperm.xlu0 %305, %v30
  %v307 = vpop.permute.xlu0 %306
  %309 = vset.pattern.permute.xlu0 4
  %310 = vperm.xlu0 %309, %v31
  %v311 = vpop.permute.xlu0 %310
  %313 = vset.pattern.permute.xlu0 4
  %314 = vperm.xlu0 %313, %v32
  %v315 = vpop.permute.xlu0 %314
  %317 = vset.pattern.permute.xlu0 4
  %318 = vperm.xlu0 %317, %v33
  %v319 = vpop.permute.xlu0 %318
  %321 = vset.pattern.permute.xlu0 4
  %322 = vperm.xlu0 %321, %v34
  %v323 = vpop.permute.xlu0 %322
  %325 = vset.pattern.permute.xlu0 4
  %326 = vperm.xlu0 %325, %v35
  %v327 = vpop.permute.xlu0 %326
  %329 = vset.pattern.permute.xlu0 4
  %330 = vperm.xlu0 %329, %v36
  %v331 = vpop.permute.xlu0 %330
  %v333 = vlaneseq
  %v334 = vshrl.u32 %v333, 7
  %v335 = vsub.s32 4, %v334
  %v336 = vrot.slane %v27, %v335
  %v337 = vmul.f32 %v303, %v336
  %v338 = vmul.f32 %v307, %v336
  %v339 = vmul.f32 %v311, %v336
  %v340 = vmul.f32 %v315, %v336
  %v341 = vmul.f32 %v319, %v336
  %v342 = vmul.f32 %v323, %v336
  %v343 = vmul.f32 %v327, %v336
  %v344 = vmul.f32 %v331, %v336
  %v345 = vadd.f32 %v293, %v337
  %v346 = vadd.f32 %v294, %v338
  %v347 = vadd.f32 %v295, %v339
  %v348 = vadd.f32 %v296, %v340
  %v349 = vadd.f32 %v297, %v341
  %v350 = vadd.f32 %v298, %v342
  %v351 = vadd.f32 %v299, %v343
  %v352 = vadd.f32 %v300, %v344
  %353 = vset.pattern.permute.xlu0 5
  %354 = vperm.xlu0 %353, %v29
  %v355 = vpop.permute.xlu0 %354
  %357 = vset.pattern.permute.xlu0 5
  %358 = vperm.xlu0 %357, %v30
  %v359 = vpop.permute.xlu0 %358
  %361 = vset.pattern.permute.xlu0 5
  %362 = vperm.xlu0 %361, %v31
  %v363 = vpop.permute.xlu0 %362
  %365 = vset.pattern.permute.xlu0 5
  %366 = vperm.xlu0 %365, %v32
  %v367 = vpop.permute.xlu0 %366
  %369 = vset.pattern.permute.xlu0 5
  %370 = vperm.xlu0 %369, %v33
  %v371 = vpop.permute.xlu0 %370
  %373 = vset.pattern.permute.xlu0 5
  %374 = vperm.xlu0 %373, %v34
  %v375 = vpop.permute.xlu0 %374
  %377 = vset.pattern.permute.xlu0 5
  %378 = vperm.xlu0 %377, %v35
  %v379 = vpop.permute.xlu0 %378
  %381 = vset.pattern.permute.xlu0 5
  %382 = vperm.xlu0 %381, %v36
  %v383 = vpop.permute.xlu0 %382
  %v385 = vlaneseq
  %v386 = vshrl.u32 %v385, 7
  %v387 = vsub.s32 5, %v386
  %v388 = vrot.slane %v27, %v387
  %v389 = vmul.f32 %v355, %v388
  %v390 = vmul.f32 %v359, %v388
  %v391 = vmul.f32 %v363, %v388
  %v392 = vmul.f32 %v367, %v388
  %v393 = vmul.f32 %v371, %v388
  %v394 = vmul.f32 %v375, %v388
  %v395 = vmul.f32 %v379, %v388
  %v396 = vmul.f32 %v383, %v388
  %v397 = vadd.f32 %v345, %v389
  %v398 = vadd.f32 %v346, %v390
  %v399 = vadd.f32 %v347, %v391
  %v400 = vadd.f32 %v348, %v392
  %v401 = vadd.f32 %v349, %v393
  %v402 = vadd.f32 %v350, %v394
  %v403 = vadd.f32 %v351, %v395
  %v404 = vadd.f32 %v352, %v396
  %405 = vset.pattern.permute.xlu0 6
  %406 = vperm.xlu0 %405, %v29
  %v407 = vpop.permute.xlu0 %406
  %409 = vset.pattern.permute.xlu0 6
  %410 = vperm.xlu0 %409, %v30
  %v411 = vpop.permute.xlu0 %410
  %413 = vset.pattern.permute.xlu0 6
  %414 = vperm.xlu0 %413, %v31
  %v415 = vpop.permute.xlu0 %414
  %417 = vset.pattern.permute.xlu0 6
  %418 = vperm.xlu0 %417, %v32
  %v419 = vpop.permute.xlu0 %418
  %421 = vset.pattern.permute.xlu0 6
  %422 = vperm.xlu0 %421, %v33
  %v423 = vpop.permute.xlu0 %422
  %425 = vset.pattern.permute.xlu0 6
  %426 = vperm.xlu0 %425, %v34
  %v427 = vpop.permute.xlu0 %426
  %429 = vset.pattern.permute.xlu0 6
  %430 = vperm.xlu0 %429, %v35
  %v431 = vpop.permute.xlu0 %430
  %433 = vset.pattern.permute.xlu0 6
  %434 = vperm.xlu0 %433, %v36
  %v435 = vpop.permute.xlu0 %434
  %v437 = vlaneseq
  %v438 = vshrl.u32 %v437, 7
  %v439 = vsub.s32 6, %v438
  %v440 = vrot.slane %v27, %v439
  %v441 = vmul.f32 %v407, %v440
  %v442 = vmul.f32 %v411, %v440
  %v443 = vmul.f32 %v415, %v440
  %v444 = vmul.f32 %v419, %v440
  %v445 = vmul.f32 %v423, %v440
  %v446 = vmul.f32 %v427, %v440
  %v447 = vmul.f32 %v431, %v440
  %v448 = vmul.f32 %v435, %v440
  %v449 = vadd.f32 %v397, %v441
  %v450 = vadd.f32 %v398, %v442
  %v451 = vadd.f32 %v399, %v443
  %v452 = vadd.f32 %v400, %v444
  %v453 = vadd.f32 %v401, %v445
  %v454 = vadd.f32 %v402, %v446
  %v455 = vadd.f32 %v403, %v447
  %v456 = vadd.f32 %v404, %v448
  %457 = vset.pattern.permute.xlu0 7
  %458 = vperm.xlu0 %457, %v29
  %v459 = vpop.permute.xlu0 %458
  %461 = vset.pattern.permute.xlu0 7
  %462 = vperm.xlu0 %461, %v30
  %v463 = vpop.permute.xlu0 %462
  %465 = vset.pattern.permute.xlu0 7
  %466 = vperm.xlu0 %465, %v31
  %v467 = vpop.permute.xlu0 %466
  %469 = vset.pattern.permute.xlu0 7
  %470 = vperm.xlu0 %469, %v32
  %v471 = vpop.permute.xlu0 %470
  %473 = vset.pattern.permute.xlu0 7
  %474 = vperm.xlu0 %473, %v33
  %v475 = vpop.permute.xlu0 %474
  %477 = vset.pattern.permute.xlu0 7
  %478 = vperm.xlu0 %477, %v34
  %v479 = vpop.permute.xlu0 %478
  %481 = vset.pattern.permute.xlu0 7
  %482 = vperm.xlu0 %481, %v35
  %v483 = vpop.permute.xlu0 %482
  %485 = vset.pattern.permute.xlu0 7
  %486 = vperm.xlu0 %485, %v36
  %v487 = vpop.permute.xlu0 %486
  %v489 = vlaneseq
  %v490 = vshrl.u32 %v489, 7
  %v491 = vsub.s32 7, %v490
  %v492 = vrot.slane %v27, %v491
  %v493 = vmul.f32 %v459, %v492
  %v494 = vmul.f32 %v463, %v492
  %v495 = vmul.f32 %v467, %v492
  %v496 = vmul.f32 %v471, %v492
  %v497 = vmul.f32 %v475, %v492
  %v498 = vmul.f32 %v479, %v492
  %v499 = vmul.f32 %v483, %v492
  %v500 = vmul.f32 %v487, %v492
  %v501 = vadd.f32 %v449, %v493
  %v502 = vadd.f32 %v450, %v494
  %v503 = vadd.f32 %v451, %v495
  %v504 = vadd.f32 %v452, %v496
  %v505 = vadd.f32 %v453, %v497
  %v506 = vadd.f32 %v454, %v498
  %v507 = vadd.f32 %v455, %v499
  %v508 = vadd.f32 %v456, %v500
  %509 = vset.pattern.permute.xlu0 8
  %510 = vperm.xlu0 %509, %v29
  %v511 = vpop.permute.xlu0 %510
  %513 = vset.pattern.permute.xlu0 8
  %514 = vperm.xlu0 %513, %v30
  %v515 = vpop.permute.xlu0 %514
  %517 = vset.pattern.permute.xlu0 8
  %518 = vperm.xlu0 %517, %v31
  %v519 = vpop.permute.xlu0 %518
  %521 = vset.pattern.permute.xlu0 8
  %522 = vperm.xlu0 %521, %v32
  %v523 = vpop.permute.xlu0 %522
  %525 = vset.pattern.permute.xlu0 8
  %526 = vperm.xlu0 %525, %v33
  %v527 = vpop.permute.xlu0 %526
  %529 = vset.pattern.permute.xlu0 8
  %530 = vperm.xlu0 %529, %v34
  %v531 = vpop.permute.xlu0 %530
  %533 = vset.pattern.permute.xlu0 8
  %534 = vperm.xlu0 %533, %v35
  %v535 = vpop.permute.xlu0 %534
  %537 = vset.pattern.permute.xlu0 8
  %538 = vperm.xlu0 %537, %v36
  %v539 = vpop.permute.xlu0 %538
  %v541 = vlaneseq
  %v542 = vshrl.u32 %v541, 7
  %v543 = vsub.s32 0, %v542
  %v544 = vrot.slane %v28, %v543
  %v545 = vmul.f32 %v511, %v544
  %v546 = vmul.f32 %v515, %v544
  %v547 = vmul.f32 %v519, %v544
  %v548 = vmul.f32 %v523, %v544
  %v549 = vmul.f32 %v527, %v544
  %v550 = vmul.f32 %v531, %v544
  %v551 = vmul.f32 %v535, %v544
  %v552 = vmul.f32 %v539, %v544
  %v553 = vadd.f32 %v501, %v545
  %v554 = vadd.f32 %v502, %v546
  %v555 = vadd.f32 %v503, %v547
  %v556 = vadd.f32 %v504, %v548
  %v557 = vadd.f32 %v505, %v549
  %v558 = vadd.f32 %v506, %v550
  %v559 = vadd.f32 %v507, %v551
  %v560 = vadd.f32 %v508, %v552
  %561 = vset.pattern.permute.xlu0 9
  %562 = vperm.xlu0 %561, %v29
  %v563 = vpop.permute.xlu0 %562
  %565 = vset.pattern.permute.xlu0 9
  %566 = vperm.xlu0 %565, %v30
  %v567 = vpop.permute.xlu0 %566
  %569 = vset.pattern.permute.xlu0 9
  %570 = vperm.xlu0 %569, %v31
  %v571 = vpop.permute.xlu0 %570
  %573 = vset.pattern.permute.xlu0 9
  %574 = vperm.xlu0 %573, %v32
  %v575 = vpop.permute.xlu0 %574
  %577 = vset.pattern.permute.xlu0 9
  %578 = vperm.xlu0 %577, %v33
  %v579 = vpop.permute.xlu0 %578
  %581 = vset.pattern.permute.xlu0 9
  %582 = vperm.xlu0 %581, %v34
  %v583 = vpop.permute.xlu0 %582
  %585 = vset.pattern.permute.xlu0 9
  %586 = vperm.xlu0 %585, %v35
  %v587 = vpop.permute.xlu0 %586
  %589 = vset.pattern.permute.xlu0 9
  %590 = vperm.xlu0 %589, %v36
  %v591 = vpop.permute.xlu0 %590
  %v593 = vlaneseq
  %v594 = vshrl.u32 %v593, 7
  %v595 = vsub.s32 1, %v594
  %v596 = vrot.slane %v28, %v595
  %v597 = vmul.f32 %v563, %v596
  %v598 = vmul.f32 %v567, %v596
  %v599 = vmul.f32 %v571, %v596
  %v600 = vmul.f32 %v575, %v596
  %v601 = vmul.f32 %v579, %v596
  %v602 = vmul.f32 %v583, %v596
  %v603 = vmul.f32 %v587, %v596
  %v604 = vmul.f32 %v591, %v596
  %v605 = vadd.f32 %v553, %v597
  %v606 = vadd.f32 %v554, %v598
  %v607 = vadd.f32 %v555, %v599
  %v608 = vadd.f32 %v556, %v600
  %v609 = vadd.f32 %v557, %v601
  %v610 = vadd.f32 %v558, %v602
  %v611 = vadd.f32 %v559, %v603
  %v612 = vadd.f32 %v560, %v604
  %v613 = vmax.f32 %v605, 0.0
  %v614 = vmax.f32 %v606, 0.0
  %v615 = vmax.f32 %v607, 0.0
  %v616 = vmax.f32 %v608, 0.0
  %v617 = vmax.f32 %v609, 0.0
  %v618 = vmax.f32 %v610, 0.0
  %v619 = vmax.f32 %v611, 0.0
  %v620 = vmax.f32 %v612, 0.0
  %v621 = vld [vmem:[%s3] sm:$0xf]
  %v622 = vld [vmem:[%s3 + $0x4] sm:$0xf]
  %v623 = vld [vmem:[%s3 + $0x8] sm:$0xf]
  %v624 = vld [vmem:[%s3 + $0xc] sm:$0xf]
  %v625 = vld [vmem:[%s3 + $0x10] sm:$0xf]
  %v626 = vld [vmem:[%s3 + $0x14] sm:$0xf]
  %v627 = vld [vmem:[%s3 + $0x18] sm:$0xf]
  %v628 = vld [vmem:[%s3 + $0x1c] sm:$0xf]
  %v629 = vpack.c.bf16 %v614, %v613
  %v630 = vpack.c.bf16 %v616, %v615
  %v631 = vpack.c.bf16 %v618, %v617
  %v632 = vpack.c.bf16 %v620, %v619
  %v633 = vld [vmem:[%s4] sm:$0xff]
  %v634 = vld [vmem:[%s4 + $0x8] sm:$0xff]
  %v635 = vld [vmem:[%s4 + $0x10] sm:$0xff]
  %v636 = vld [vmem:[%s4 + $0x18] sm:$0xff]
  %v637 = vld [vmem:[%s4 + $0x20] sm:$0xff]
  %v638 = vld [vmem:[%s4 + $0x28] sm:$0xff]
  %v639 = vld [vmem:[%s4 + $0x30] sm:$0xff]
  %v640 = vld [vmem:[%s4 + $0x38] sm:$0xff]
  %642 = vset.pattern.permute.xlu0 0
  %643 = vperm.xlu0 %642, %v633
  %v644 = vpop.permute.xlu0 %643
  %647 = vset.pattern.permute.xlu0 0
  %648 = vperm.xlu0 %647, %v634
  %v649 = vpop.permute.xlu0 %648
  %652 = vset.pattern.permute.xlu0 0
  %653 = vperm.xlu0 %652, %v635
  %v654 = vpop.permute.xlu0 %653
  %657 = vset.pattern.permute.xlu0 0
  %658 = vperm.xlu0 %657, %v636
  %v659 = vpop.permute.xlu0 %658
  %662 = vset.pattern.permute.xlu0 0
  %663 = vperm.xlu0 %662, %v637
  %v664 = vpop.permute.xlu0 %663
  %667 = vset.pattern.permute.xlu0 0
  %668 = vperm.xlu0 %667, %v638
  %v669 = vpop.permute.xlu0 %668
  %672 = vset.pattern.permute.xlu0 0
  %673 = vperm.xlu0 %672, %v639
  %v674 = vpop.permute.xlu0 %673
  %677 = vset.pattern.permute.xlu0 0
  %678 = vperm.xlu0 %677, %v640
  %v679 = vpop.permute.xlu0 %678
  %v689 = vunpack.c.l.b16 %v621
  %v690 = vunpack.c.l.b16 %v622
  %v691 = vunpack.c.l.b16 %v623
  %v692 = vunpack.c.l.b16 %v624
  %v693 = vunpack.c.l.b16 %v625
  %v694 = vunpack.c.l.b16 %v626
  %v695 = vunpack.c.l.b16 %v627
  %v696 = vunpack.c.l.b16 %v628
  %v697 = vpack.c.b16 %v690, %v689
  %v698 = vpack.c.b16 %v692, %v691
  %v699 = vpack.c.b16 %v694, %v693
  %v700 = vpack.c.b16 %v696, %v695
  %vm701 = vcmask 523264
  %v703 = vsel %vm701, %v697, 0
  %v706 = vsel %vm701, %v698, 0
  %v709 = vsel %vm701, %v699, 0
  %v712 = vsel %vm701, %v700, 0
  %714 = vmatprep.subr.bf16.mxu0 0
  %715 = vmatpush1.bf16.msra.mxu0 %v629
  %716 = vmatprep.subr.bf16.mxu0 0
  %717 = vmatpush1.bf16.msra.mxu0 %v630
  %718 = vmatprep.subr.bf16.mxu0 0
  %719 = vmatpush1.bf16.msra.mxu0 %v631
  %720 = vmatprep.subr.bf16.mxu0 0
  %721 = vmatpush1.bf16.msra.mxu0 %v632
  %722 = vmatprep.subr.bf16.mxu0 0
  %723 = vmatpush1.bf16.msra.mxu0 0
  %724 = vmatprep.subr.bf16.mxu0 0
  %725 = vmatpush1.bf16.msra.mxu0 0
  %726 = vmatprep.subr.bf16.mxu0 0
  %727 = vmatpush1.bf16.msra.mxu0 0
  %728 = vmatprep.subr.bf16.mxu0 0
  %729 = vmatpush1.bf16.msra.mxu0 0
  %730 = vmatprep.subr.bf16.mxu0 0
  %731 = vmatpush1.bf16.msra.mxu0 0
  %732 = vmatprep.subr.bf16.mxu0 0
  %733 = vmatpush1.bf16.msra.mxu0 0
  %734 = vmatprep.subr.bf16.mxu0 0
  %735 = vmatpush1.bf16.msra.mxu0 0
  %736 = vmatprep.subr.bf16.mxu0 0
  %737 = vmatpush1.bf16.msra.mxu0 0
  %738 = vmatprep.subr.bf16.mxu0 0
  %739 = vmatpush1.bf16.msra.mxu0 0
  %740 = vmatprep.subr.bf16.mxu0 0
  %741 = vmatpush1.bf16.msra.mxu0 0
  %742 = vmatprep.subr.bf16.mxu0 0
  %743 = vmatpush1.bf16.msra.mxu0 0
  %744 = vmatprep.subr.bf16.mxu0 0
  %745 = vmatpush1.bf16.msra.mxu0 0
  %746 = vmatprep.mubr.bf16.mxu0 0
  %747 = vmatmul.mubr.bf16.gmra.mrb[0].mxu0 %v703
  %v748 = vpop.f32.mrb[0].mxu0
  %v749 = vadd.f32 %v644, %v748
  %v750 = vpop.f32.mrb[0].mxu0
  %v751 = vpop.f32.mrb[0].mxu0
  %v752 = vadd.f32 %v649, %v751
  %v753 = vpop.f32.mrb[0].mxu0
  %754 = vmatprep.mubr.bf16.mxu0 0
  %755 = vmatmul.mubr.bf16.gmra.mrb[0].mxu0 %v706
  %v756 = vpop.f32.mrb[0].mxu0
  %v757 = vadd.f32 %v654, %v756
  %v758 = vpop.f32.mrb[0].mxu0
  %v759 = vpop.f32.mrb[0].mxu0
  %v760 = vadd.f32 %v659, %v759
  %v761 = vpop.f32.mrb[0].mxu0
  %762 = vmatprep.mubr.bf16.mxu0 0
  %763 = vmatmul.mubr.bf16.gmra.mrb[0].mxu0 %v709
  %v764 = vpop.f32.mrb[0].mxu0
  %v765 = vadd.f32 %v664, %v764
  %v766 = vpop.f32.mrb[0].mxu0
  %v767 = vpop.f32.mrb[0].mxu0
  %v768 = vadd.f32 %v669, %v767
  %v769 = vpop.f32.mrb[0].mxu0
  %770 = vmatprep.mubr.bf16.mxu0 0
  %771 = vmatmul.mubr.bf16.gmra.mrb[0].mxu0 %v712
  %v772 = vpop.f32.mrb[0].mxu0
  %v773 = vadd.f32 %v674, %v772
  %v774 = vpop.f32.mrb[0].mxu0
  %v775 = vpop.f32.mrb[0].mxu0
  %v776 = vadd.f32 %v679, %v775
  %v777 = vpop.f32.mrb[0].mxu0
  %778 = vdwg.mxu0
  %v779 = vmax.f32 %v749, 0.0
  %v780 = vmax.f32 %v752, 0.0
  %v781 = vmax.f32 %v757, 0.0
  %v782 = vmax.f32 %v760, 0.0
  %v783 = vmax.f32 %v765, 0.0
  %v784 = vmax.f32 %v768, 0.0
  %v785 = vmax.f32 %v773, 0.0
  %v786 = vmax.f32 %v776, 0.0
  %v787 = vld [vmem:[%s5] sm:$0xf]
  %v788 = vld [vmem:[%s5 + $0x4] sm:$0xf]
  %v789 = vld [vmem:[%s5 + $0x8] sm:$0xf]
  %v790 = vld [vmem:[%s5 + $0xc] sm:$0xf]
  %v791 = vpack.c.bf16 %v780, %v779
  %v792 = vpack.c.bf16 %v782, %v781
  %v793 = vpack.c.bf16 %v784, %v783
  %v794 = vpack.c.bf16 %v786, %v785
  %v795 = vld [vmem:[%s6] sm:$0xff]
  %v796 = vld [vmem:[%s6 + $0x8] sm:$0xff]
  %v797 = vld [vmem:[%s6 + $0x10] sm:$0xff]
  %v798 = vld [vmem:[%s6 + $0x18] sm:$0xff]
  %800 = vset.pattern.permute.xlu0 0
  %801 = vperm.xlu0 %800, %v795
  %v802 = vpop.permute.xlu0 %801
  %805 = vset.pattern.permute.xlu0 0
  %806 = vperm.xlu0 %805, %v796
  %v807 = vpop.permute.xlu0 %806
  %810 = vset.pattern.permute.xlu0 0
  %811 = vperm.xlu0 %810, %v797
  %v812 = vpop.permute.xlu0 %811
  %815 = vset.pattern.permute.xlu0 0
  %816 = vperm.xlu0 %815, %v798
  %v817 = vpop.permute.xlu0 %816
  %v823 = vunpack.c.l.b16 %v787
  %v824 = vunpack.c.l.b16 %v788
  %v825 = vunpack.c.l.b16 %v789
  %v826 = vunpack.c.l.b16 %v790
  %v827 = vpack.c.b16 %v824, %v823
  %v828 = vpack.c.b16 %v826, %v825
  %v830 = vsel %vm701, %v827, 0
  %v833 = vsel %vm701, %v828, 0
  %835 = vmatprep.subr.bf16.mxu0 0
  %836 = vmatpush1.bf16.msra.mxu0 %v791
  %837 = vmatprep.subr.bf16.mxu0 0
  %838 = vmatpush1.bf16.msra.mxu0 %v792
  %839 = vmatprep.subr.bf16.mxu0 0
  %840 = vmatpush1.bf16.msra.mxu0 %v793
  %841 = vmatprep.subr.bf16.mxu0 0
  %842 = vmatpush1.bf16.msra.mxu0 %v794
  %843 = vmatprep.subr.bf16.mxu0 0
  %844 = vmatpush1.bf16.msra.mxu0 0
  %845 = vmatprep.subr.bf16.mxu0 0
  %846 = vmatpush1.bf16.msra.mxu0 0
  %847 = vmatprep.subr.bf16.mxu0 0
  %848 = vmatpush1.bf16.msra.mxu0 0
  %849 = vmatprep.subr.bf16.mxu0 0
  %850 = vmatpush1.bf16.msra.mxu0 0
  %851 = vmatprep.subr.bf16.mxu0 0
  %852 = vmatpush1.bf16.msra.mxu0 0
  %853 = vmatprep.subr.bf16.mxu0 0
  %854 = vmatpush1.bf16.msra.mxu0 0
  %855 = vmatprep.subr.bf16.mxu0 0
  %856 = vmatpush1.bf16.msra.mxu0 0
  %857 = vmatprep.subr.bf16.mxu0 0
  %858 = vmatpush1.bf16.msra.mxu0 0
  %859 = vmatprep.subr.bf16.mxu0 0
  %860 = vmatpush1.bf16.msra.mxu0 0
  %861 = vmatprep.subr.bf16.mxu0 0
  %862 = vmatpush1.bf16.msra.mxu0 0
  %863 = vmatprep.subr.bf16.mxu0 0
  %864 = vmatpush1.bf16.msra.mxu0 0
  %865 = vmatprep.subr.bf16.mxu0 0
  %866 = vmatpush1.bf16.msra.mxu0 0
  %867 = vmatprep.mubr.bf16.mxu0 0
  %868 = vmatmul.mubr.bf16.gmra.mrb[0].mxu0 %v830
  %v869 = vpop.f32.mrb[0].mxu0
  %v870 = vadd.f32 %v802, %v869
  %v871 = vpop.f32.mrb[0].mxu0
  %v872 = vpop.f32.mrb[0].mxu0
  %v873 = vadd.f32 %v807, %v872
  %v874 = vpop.f32.mrb[0].mxu0
  %875 = vmatprep.mubr.bf16.mxu0 0
  %876 = vmatmul.mubr.bf16.gmra.mrb[0].mxu0 %v833
  %v877 = vpop.f32.mrb[0].mxu0
  %v878 = vadd.f32 %v812, %v877
  %v879 = vpop.f32.mrb[0].mxu0
  %v880 = vpop.f32.mrb[0].mxu0
  %v881 = vadd.f32 %v817, %v880
  %v882 = vpop.f32.mrb[0].mxu0
  %883 = vdwg.mxu0
  %vm884 = vcmask 64512
  %885 = vst.msk [vmem:[%s7] sm:$0xff] %vm884, %v870
  %886 = vst.msk [vmem:[%s7 + $0x8] sm:$0xff] %vm884, %v873
  %887 = vst.msk [vmem:[%s7 + $0x10] sm:$0xff] %vm884, %v878
  %888 = vst.msk [vmem:[%s7 + $0x18] sm:$0xff] %vm884, %v881
  // Predicated region
  $region30: #{tpu_custom_call.1} parent=0 // pred_check
    _
  $region31: #{tpu_custom_call.1} parent=0 // pred_check_branch
    %890 = sbr.rel (0) target = $region33
  $region32: #{tpu_custom_call.1} parent=0 // pred_region
    _
  $region33: #{tpu_custom_call.1} parent=0 // pred_fallthru
    _
  // Predicated region
  $region34: #{tpu_custom_call.1} parent=0 // pred_check
    _
  $region35: #{tpu_custom_call.1} parent=0 // pred_check_branch
    %892 = sbr.rel (0) target = $region37
  $region36: #{tpu_custom_call.1} parent=0 // pred_region
    _
  $region37: #{tpu_custom_call.1} parent=0 // pred_fallthru
    _

</llo_original>
